<compile_context>
chip_gen: v7x
topology: tpu7x:2x2x1
jax: 0.10.0
libtpu: 0.0.40
codegen_flags: <defaults>
</compile_context>

<pallas_src>
import jax
import jax.numpy as jnp
from jax.experimental import pallas as pl
from jax.experimental.pallas import tpu as pltpu


def _mlp_kernel(x_ref, w1_ref, b1_ref, w2_ref, b2_ref, w3_ref, b3_ref, o_ref):
    # x_ref: (1, TILE_B) f32 -- batch on lanes.
    x = x_ref[...]

    # fc1 (Linear 1->64) + ReLU: K=1 contraction -> VPU broadcast FMA in f32
    # (v5e VPU has no bf16 ALU, so keep arithmetic f32 and cast afterwards).
    #   (64,1) * (1,TILE_B) + (64,1) -> (64, TILE_B)
    h1 = jnp.maximum(w1_ref[...] * x + b1_ref[...], 0.0)
    h1 = h1.astype(jnp.bfloat16)  # bf16 MXU operand; halves vreg pushes & VMEM

    # fc2 (Linear 64->32) + ReLU: bf16 MXU matmul, f32 accumulation,
    # batch in the lane-dense N axis.
    #   (32,64)bf16 @ (64,TILE_B)bf16 -> (32, TILE_B)f32
    h2 = jnp.dot(w2_ref[...], h1, preferred_element_type=jnp.float32)
    h2 = jnp.maximum(h2 + b2_ref[...], 0.0)

    # fc3 (Linear 32->1): VPU multiply + sublane reduce (off the MXU).
    #   sum_k w3[k] * h2[k, :] -> (1, TILE_B)
    out = jnp.sum(h2 * w3_ref[...], axis=0, keepdims=True) + b3_ref[...]
    o_ref[...] = out.astype(o_ref.dtype)


def _round_up(n, m):
    return ((n + m - 1) // m) * m


def regression_net_forward(x, params, tile_b_max=16384, min_tiles=2):
    """x: (B, 1) float32 (PyTorch-style).  params: PyTorch-native (out, in)
    weights and (out, 1) column biases.  Returns (B, 1) float32."""
    w1, b1 = params["w1"], params["b1"]   # (64, 1), (64, 1)
    w2, b2 = params["w2"], params["b2"]   # (32, 64), (32, 1)
    w3, b3 = params["w3"], params["b3"]   # (1, 32), (1, 1)

    # One-time operand prep (outside the kernel / grid loop):
    w2_bf16 = w2.astype(jnp.bfloat16)     # bf16 MXU stationary weight
    w3_col = w3.reshape(32, 1)            # column layout for the VPU reduce

    B = x.shape[0]
    # (B,1) -> (1,B): free metadata reshape; batch goes to the lane axis.
    x_lanes = x.reshape(1, B).astype(jnp.float32)

    # Balanced lane tiling: at least `min_tiles` tiles (both v7x TensorCores
    # get work), each a multiple of 128 lanes, padding < 128 + alignment.
    n_tiles = max(min_tiles, pl.cdiv(B, tile_b_max))
    tile_b = _round_up(pl.cdiv(B, n_tiles), 128)
    B_pad = n_tiles * tile_b
    if B_pad != B:
        # Zero pad columns flow through the MLP harmlessly and are sliced off.
        x_lanes = jnp.pad(x_lanes, ((0, 0), (0, B_pad - B)))

    def const_spec(shape):
        # Whole-array block, constant index map -> VMEM-resident across grid.
        return pl.BlockSpec(shape, lambda i: (0, 0))

    # Advisory cost so XLA schedules the custom call sensibly.
    weight_bytes = sum(int(a.size) * 4 for a in (w1, b1, w2, b2, w3, b3))
    flops_per_elem = 2 * 64 + 2 * 64 * 32 + 2 * 32 + 64 + 32 + 1
    cost = pl.CostEstimate(
        flops=int(B_pad) * flops_per_elem,
        transcendentals=0,
        bytes_accessed=8 * int(B_pad) + weight_bytes,
    )

    out = pl.pallas_call(
        _mlp_kernel,
        out_shape=jax.ShapeDtypeStruct((1, B_pad), jnp.float32),
        grid=(n_tiles,),
        in_specs=[
            pl.BlockSpec((1, tile_b), lambda i: (0, i)),   # x: lane-dense tiles
            const_spec(w1.shape), const_spec(b1.shape),
            const_spec(w2_bf16.shape), const_spec(b2.shape),
            const_spec(w3_col.shape), const_spec(b3.shape),
        ],
        out_specs=pl.BlockSpec((1, tile_b), lambda i: (0, i)),
        compiler_params=pltpu.CompilerParams(
            # Batch tiles are independent -> shard across TensorCores.
            dimension_semantics=("parallel",),
        ),
        cost_estimate=cost,
    )(x_lanes, w1, b1, w2_bf16, b2, w3_col, b3)

    if B_pad != B:
        out = out[:, :B]
    return out.reshape(B, 1)


def init_params(key):
    """PyTorch Linear default init (U[-1/sqrt(fan_in), 1/sqrt(fan_in)]),
    stored in PyTorch-native (out_features, in_features) layout with
    (out_features, 1) column biases."""
    def linear(key, fan_in, fan_out):
        kw, kb = jax.random.split(key)
        bound = 1.0 / jnp.sqrt(jnp.float32(fan_in))
        w = jax.random.uniform(kw, (fan_out, fan_in), jnp.float32, -bound, bound)
        b = jax.random.uniform(kb, (fan_out, 1), jnp.float32, -bound, bound)
        return w, b

    k1, k2, k3 = jax.random.split(key, 3)
    w1, b1 = linear(k1, 1, 64)
    w2, b2 = linear(k2, 64, 32)
    w3, b3 = linear(k3, 32, 1)
    return {"w1": w1, "b1": b1, "w2": w2, "b2": b2, "w3": w3, "b3": b3}


def reference_forward_bf16(x, p):
    """Reference matching the kernel's numerics: fc2 with bf16 MXU operands
    and f32 accumulation (the kernel's only reduced-precision step)."""
    h1 = jnp.maximum(x @ p["w1"].T + p["b1"].T, 0.0)
    h2 = jnp.dot(h1.astype(jnp.bfloat16), p["w2"].T.astype(jnp.bfloat16),
                 preferred_element_type=jnp.float32)
    h2 = jnp.maximum(h2 + p["b2"].T, 0.0)
    return h2 @ p["w3"].T + p["b3"].T


if __name__ == "__main__":
    key = jax.random.PRNGKey(0)
    kx, kp = jax.random.split(key)

    B = 8
    x = jax.random.normal(kx, (B, 1), jnp.float32)
    params = init_params(kp)

    out = regression_net_forward(x, params)
    out = jax.block_until_ready(out)

    ref = reference_forward_bf16(x, params)
    assert out.shape == (B, 1)
    # bf16 fc2 operands (f32 accumulation) -> compare against a bf16-matched
    # reference; residual diffs are only f32 summation-order effects.
    assert jnp.allclose(out, ref, atol=1e-3, rtol=1e-3), "mismatch vs reference"

    print("KERNEL_OK")
</pallas_src>

<mosaic_0001>
module attributes {stable_mosaic.version = 11 : i64} {
  func.func @_mlp_kernel(%arg0: i32, %arg1: memref<1x128xf32, #tpu.memory_space<vmem>>, %arg2: memref<64x1xf32, #tpu.memory_space<vmem>>, %arg3: memref<64x1xf32, #tpu.memory_space<vmem>>, %arg4: memref<32x64xbf16, #tpu.memory_space<vmem>>, %arg5: memref<32x1xf32, #tpu.memory_space<vmem>>, %arg6: memref<32x1xf32, #tpu.memory_space<vmem>>, %arg7: memref<1x1xf32, #tpu.memory_space<vmem>>, %arg8: memref<1x128xf32, #tpu.memory_space<vmem>>) attributes {dimension_semantics = [#tpu.dimension_semantics<parallel>], iteration_bounds = array<i64: 2>, scalar_prefetch = 0 : i64, scratch_operands = 0 : i64, tpu.core_type = #tpu.core_type<tc>, window_params = [{transform_indices = @transform_0, window_bounds = array<i64: 1, 128>}, {pipeline_mode = #tpu.pipeline_mode<synchronous>, transform_indices = @transform_1, window_bounds = array<i64: 64, 1>}, {pipeline_mode = #tpu.pipeline_mode<synchronous>, transform_indices = @transform_2, window_bounds = array<i64: 64, 1>}, {pipeline_mode = #tpu.pipeline_mode<synchronous>, transform_indices = @transform_3, window_bounds = array<i64: 32, 64>}, {pipeline_mode = #tpu.pipeline_mode<synchronous>, transform_indices = @transform_4, window_bounds = array<i64: 32, 1>}, {pipeline_mode = #tpu.pipeline_mode<synchronous>, transform_indices = @transform_5, window_bounds = array<i64: 32, 1>}, {pipeline_mode = #tpu.pipeline_mode<synchronous>, transform_indices = @transform_6, window_bounds = array<i64: 1, 1>}, {transform_indices = @transform_7, window_bounds = array<i64: 1, 128>}]} {
    %c0 = arith.constant 0 : index
    %c0_0 = arith.constant 0 : index
    %0 = vector.load %arg1[%c0, %c0_0] : memref<1x128xf32, #tpu.memory_space<vmem>>, vector<1x128xf32>
    %c0_1 = arith.constant 0 : index
    %c0_2 = arith.constant 0 : index
    %1 = vector.load %arg2[%c0_1, %c0_2] : memref<64x1xf32, #tpu.memory_space<vmem>>, vector<64x1xf32>
    %2 = vector.broadcast %1 : vector<64x1xf32> to vector<64x128xf32>
    %3 = vector.broadcast %0 : vector<1x128xf32> to vector<64x128xf32>
    %4 = arith.mulf %2, %3 : vector<64x128xf32>
    %c0_3 = arith.constant 0 : index
    %c0_4 = arith.constant 0 : index
    %5 = vector.load %arg3[%c0_3, %c0_4] : memref<64x1xf32, #tpu.memory_space<vmem>>, vector<64x1xf32>
    %6 = vector.broadcast %5 : vector<64x1xf32> to vector<64x128xf32>
    %7 = arith.addf %4, %6 : vector<64x128xf32>
    %cst = arith.constant 0.000000e+00 : f32
    %8 = vector.broadcast %cst : f32 to vector<64x128xf32>
    %9 = arith.maximumf %7, %8 : vector<64x128xf32>
    %10 = arith.truncf %9 : vector<64x128xf32> to vector<64x128xbf16>
    %c0_5 = arith.constant 0 : index
    %c0_6 = arith.constant 0 : index
    %11 = vector.load %arg4[%c0_5, %c0_6] : memref<32x64xbf16, #tpu.memory_space<vmem>>, vector<32x64xbf16>
    %cst_7 = arith.constant dense<0.000000e+00> : vector<32x128xf32>
    %12 = tpu.matmul %11, %10, %cst_7 {dimension_numbers = #tpu.dot_dimension_numbers<[1], [0], [0], [1], [0, 0, 1, 1], [], []>} : vector<32x64xbf16>, vector<64x128xbf16>, vector<32x128xf32> -> vector<32x128xf32>
    %c0_8 = arith.constant 0 : index
    %c0_9 = arith.constant 0 : index
    %13 = vector.load %arg5[%c0_8, %c0_9] : memref<32x1xf32, #tpu.memory_space<vmem>>, vector<32x1xf32>
    %14 = vector.broadcast %13 : vector<32x1xf32> to vector<32x128xf32>
    %15 = arith.addf %12, %14 : vector<32x128xf32>
    %cst_10 = arith.constant 0.000000e+00 : f32
    %16 = vector.broadcast %cst_10 : f32 to vector<32x128xf32>
    %17 = arith.maximumf %15, %16 : vector<32x128xf32>
    %c0_11 = arith.constant 0 : index
    %c0_12 = arith.constant 0 : index
    %18 = vector.load %arg6[%c0_11, %c0_12] : memref<32x1xf32, #tpu.memory_space<vmem>>, vector<32x1xf32>
    %19 = vector.broadcast %18 : vector<32x1xf32> to vector<32x128xf32>
    %20 = arith.mulf %17, %19 : vector<32x128xf32>
    %cst_13 = arith.constant dense<0.000000e+00> : vector<128xf32>
    %21 = vector.multi_reduction <add>, %20, %cst_13 [0] : vector<32x128xf32> to vector<128xf32>
    %22 = vector.shape_cast %21 : vector<128xf32> to vector<1x128xf32>
    %c0_14 = arith.constant 0 : index
    %c0_15 = arith.constant 0 : index
    %23 = vector.load %arg7[%c0_14, %c0_15] : memref<1x1xf32, #tpu.memory_space<vmem>>, vector<1x1xf32>
    %24 = vector.broadcast %23 : vector<1x1xf32> to vector<1x128xf32>
    %25 = arith.addf %22, %24 : vector<1x128xf32>
    %c0_16 = arith.constant 0 : index
    %c0_17 = arith.constant 0 : index
    %26 = vector.load %arg8[%c0_16, %c0_17] : memref<1x128xf32, #tpu.memory_space<vmem>>, vector<1x128xf32>
    tpu.vector_store %arg8[%c0_16, %c0_17], %25 {strides = array<i32>} : memref<1x128xf32, #tpu.memory_space<vmem>>, vector<1x128xf32>,
    return
  }
  func.func @transform_0(%arg0: i32) -> (i32, i32) {
    %c0_i32 = arith.constant 0 : i32
    %c0_i32_0 = arith.constant 0 : i32
    return %c0_i32, %arg0 : i32, i32
  }
  func.func @transform_1(%arg0: i32) -> (i32, i32) {
    %c0_i32 = arith.constant 0 : i32
    %c0_i32_0 = arith.constant 0 : i32
    %c0_i32_1 = arith.constant 0 : i32
    return %c0_i32, %c0_i32_0 : i32, i32
  }
  func.func @transform_2(%arg0: i32) -> (i32, i32) {
    %c0_i32 = arith.constant 0 : i32
    %c0_i32_0 = arith.constant 0 : i32
    %c0_i32_1 = arith.constant 0 : i32
    return %c0_i32, %c0_i32_0 : i32, i32
  }
  func.func @transform_3(%arg0: i32) -> (i32, i32) {
    %c0_i32 = arith.constant 0 : i32
    %c0_i32_0 = arith.constant 0 : i32
    %c0_i32_1 = arith.constant 0 : i32
    return %c0_i32, %c0_i32_0 : i32, i32
  }
  func.func @transform_4(%arg0: i32) -> (i32, i32) {
    %c0_i32 = arith.constant 0 : i32
    %c0_i32_0 = arith.constant 0 : i32
    %c0_i32_1 = arith.constant 0 : i32
    return %c0_i32, %c0_i32_0 : i32, i32
  }
  func.func @transform_5(%arg0: i32) -> (i32, i32) {
    %c0_i32 = arith.constant 0 : i32
    %c0_i32_0 = arith.constant 0 : i32
    %c0_i32_1 = arith.constant 0 : i32
    return %c0_i32, %c0_i32_0 : i32, i32
  }
  func.func @transform_6(%arg0: i32) -> (i32, i32) {
    %c0_i32 = arith.constant 0 : i32
    %c0_i32_0 = arith.constant 0 : i32
    %c0_i32_1 = arith.constant 0 : i32
    return %c0_i32, %c0_i32_0 : i32, i32
  }
  func.func @transform_7(%arg0: i32) -> (i32, i32) {
    %c0_i32 = arith.constant 0 : i32
    %c0_i32_0 = arith.constant 0 : i32
    return %c0_i32, %arg0 : i32, i32
  }
}

</mosaic_0001>

<llo_original>
// kernel: tpu_custom_call.1
$region0: #{tpu_custom_call.1}
  #allocation0 [shape = 'u32[]', space=smem, size = 0x4, offset = 0x4, fixed_abs, tag = 'smem constant byte address 0x4 - core index']
  #allocation1 [shape = 'u32[144,128]{1,0:T(1,128)}', space=vmem, size = 0x12000, scoped, tag = 'internal scratch']
  #allocation2 [shape = 'f32[1,1]{1,0:T(1,128)S(1)}', space=vmem, size = 0x200, scoped, tag = 'scoped memory for tpu_custom_call.1']
  %s0 = inlined_call_operand.vmem [shape: f32[1,256], index: 0, kind: input, shape index: {}]
  %s1 = inlined_call_operand.vmem [shape: f32[64,1], index: 1, kind: input, shape index: {}]
  %s2 = inlined_call_operand.vmem [shape: f32[64,1], index: 2, kind: input, shape index: {}]
  %s3 = inlined_call_operand.vmem [shape: bf16[32,64], index: 3, kind: input, shape index: {}]
  %s4 = inlined_call_operand.vmem [shape: f32[32,1], index: 4, kind: input, shape index: {}]
  %s5 = inlined_call_operand.vmem [shape: f32[32,1], index: 5, kind: input, shape index: {}]
  %s6 = inlined_call_operand.<no memory space> [shape: f32[1,1], index: 6, kind: input, shape index: {}]
  %s7 = inlined_call_operand.hbm [shape: f32[1,256], index: 7, kind: output, shape index: {}]
  %s8 = sld [smem:[#allocation0]]
  $region61: #{tpu_custom_call.1} parent=0
    _
  %s10 = ssub.s32 1, %s8
  %s11 = scalar_select 0, %s10, %s8
  %v12 = vstv %s6
  %13 = vst [vmem:[#allocation2] sm:$0x1] %v12
  $region1: #{tpu_custom_call.1} parent=0
    #allocation3 [shape = 'u8[1024]{0}', space=vmem, size = 0x400, scoped, tag = 'output window, operand 0']
    #allocation4 [shape = 's32[2]{0}', space=sflag, size = 0x8, scoped, tag = 'scoped memory for tpu_custom_call.1']
    %14 = vsyncpa [#allocation4], 0
    %s15 = scalar_lea.sflag [#allocation4], 1
    %16 = vsyncpa %s15, 0
    loop: start=0, step=1, limit=4
    $region2: #{tpu_custom_call.1} parent=1 // loop_pre_header
      _
    $region3: #{tpu_custom_call.1} parent=1 // loop_header
      %s18 = sphi 0, %s22
      %p19 = scmp.ge.s32.totalorder %s18, 4
      %s28 = sphi 0, %s30
      %s31 = sphi 0, %s28
      %s32 = sphi 0, %s31
      %s48 = sphi 0, %s32
      %s52 = sphi 0, %s52
      %s54 = sphi 0, %s52
      %s55 = sphi 0, %s54
      %s69 = sphi 0, %s55
      %s73 = sphi 0, %s73
      %s75 = sphi 0, %s73
      %s76 = sphi 0, %s75
      %s90 = sphi 0, %s76
      %s94 = sphi 0, %s94
      %s96 = sphi 0, %s94
      %s97 = sphi 0, %s96
      %s111 = sphi 0, %s97
      %s115 = sphi 0, %s115
      %s117 = sphi 0, %s115
      %s118 = sphi 0, %s117
      %s132 = sphi 0, %s118
      %s136 = sphi 0, %s136
      %s138 = sphi 0, %s136
      %s139 = sphi 0, %s138
      %s153 = sphi 0, %s139
      %s157 = sphi 0, %s157
      %s159 = sphi 0, %s157
      %s160 = sphi 0, %s159
      %s174 = sphi 0, %s160
      %s180 = sphi 0, %s182
      %s183 = sphi 0, %s180
      %s184 = sphi 0, %s183
      %s200 = sphi 0, %s184
    $region4: #{tpu_custom_call.1} parent=1 // loop_header_branch
      %21 = sbr.rel (%p19) target = $region8
    $region5: #{tpu_custom_call.1} parent=1 // loop_body
      %s23 = ssub.s32 %s18, 1
      %s24 = ssub.s32 %s18, 2
      %s25 = sadd.s32 %s18, 1
      %s26 = ssub.s32 %s18, %s25
      %p27 = scmp.eq.s32.totalorder %s26, 0
      %s29 = sadd.s32 %s28, 1
      %s30 = scalar_select %p27, %s28, %s29
      %p33 = pneg %p27
      %p34 = scmp.eq.s32.totalorder %s18, 1
      %p35 = por %p33, %p34
      %p36 = scmp.ne.s32.totalorder %s28, %s31
      %p37 = scmp.eq.s32.totalorder %s18, 0
      %p38 = por %p36, %p37
      %p39 = scmp.ne.s32.totalorder %s28, %s31
      %p40 = scmp.eq.s32.totalorder %s23, 1
      %p41 = por %p39, %p40
      %p42 = scmp.ne.s32.totalorder %s31, %s32
      %p43 = scmp.eq.s32.totalorder %s23, 0
      %p44 = por %p42, %p43
      %p45 = scmp.ne.s32.totalorder %s31, %s32
      %p46 = scmp.eq.s32.totalorder %s24, 1
      %p47 = por %p45, %p46
      %p49 = scmp.ne.s32.totalorder %s32, %s48
      %p50 = scmp.eq.s32.totalorder %s24, 0
      %p51 = por %p49, %p50
      %s53 = sadd.s32 %s52, 1
      %p56 = scmp.eq.s32.totalorder %s18, 1
      %p57 = scmp.ne.s32.totalorder %s52, %s54
      %p58 = scmp.eq.s32.totalorder %s18, 0
      %p59 = por %p57, %p58
      %p60 = scmp.ne.s32.totalorder %s52, %s54
      %p61 = scmp.eq.s32.totalorder %s23, 1
      %p62 = por %p60, %p61
      %p63 = scmp.ne.s32.totalorder %s54, %s55
      %p64 = scmp.eq.s32.totalorder %s23, 0
      %p65 = por %p63, %p64
      %p66 = scmp.ne.s32.totalorder %s54, %s55
      %p67 = scmp.eq.s32.totalorder %s24, 1
      %p68 = por %p66, %p67
      %p70 = scmp.ne.s32.totalorder %s55, %s69
      %p71 = scmp.eq.s32.totalorder %s24, 0
      %p72 = por %p70, %p71
      %s74 = sadd.s32 %s73, 1
      %p77 = scmp.eq.s32.totalorder %s18, 1
      %p78 = scmp.ne.s32.totalorder %s73, %s75
      %p79 = scmp.eq.s32.totalorder %s18, 0
      %p80 = por %p78, %p79
      %p81 = scmp.ne.s32.totalorder %s73, %s75
      %p82 = scmp.eq.s32.totalorder %s23, 1
      %p83 = por %p81, %p82
      %p84 = scmp.ne.s32.totalorder %s75, %s76
      %p85 = scmp.eq.s32.totalorder %s23, 0
      %p86 = por %p84, %p85
      %p87 = scmp.ne.s32.totalorder %s75, %s76
      %p88 = scmp.eq.s32.totalorder %s24, 1
      %p89 = por %p87, %p88
      %p91 = scmp.ne.s32.totalorder %s76, %s90
      %p92 = scmp.eq.s32.totalorder %s24, 0
      %p93 = por %p91, %p92
      %s95 = sadd.s32 %s94, 1
      %p98 = scmp.eq.s32.totalorder %s18, 1
      %p99 = scmp.ne.s32.totalorder %s94, %s96
      %p100 = scmp.eq.s32.totalorder %s18, 0
      %p101 = por %p99, %p100
      %p102 = scmp.ne.s32.totalorder %s94, %s96
      %p103 = scmp.eq.s32.totalorder %s23, 1
      %p104 = por %p102, %p103
      %p105 = scmp.ne.s32.totalorder %s96, %s97
      %p106 = scmp.eq.s32.totalorder %s23, 0
      %p107 = por %p105, %p106
      %p108 = scmp.ne.s32.totalorder %s96, %s97
      %p109 = scmp.eq.s32.totalorder %s24, 1
      %p110 = por %p108, %p109
      %p112 = scmp.ne.s32.totalorder %s97, %s111
      %p113 = scmp.eq.s32.totalorder %s24, 0
      %p114 = por %p112, %p113
      %s116 = sadd.s32 %s115, 1
      %p119 = scmp.eq.s32.totalorder %s18, 1
      %p120 = scmp.ne.s32.totalorder %s115, %s117
      %p121 = scmp.eq.s32.totalorder %s18, 0
      %p122 = por %p120, %p121
      %p123 = scmp.ne.s32.totalorder %s115, %s117
      %p124 = scmp.eq.s32.totalorder %s23, 1
      %p125 = por %p123, %p124
      %p126 = scmp.ne.s32.totalorder %s117, %s118
      %p127 = scmp.eq.s32.totalorder %s23, 0
      %p128 = por %p126, %p127
      %p129 = scmp.ne.s32.totalorder %s117, %s118
      %p130 = scmp.eq.s32.totalorder %s24, 1
      %p131 = por %p129, %p130
      %p133 = scmp.ne.s32.totalorder %s118, %s132
      %p134 = scmp.eq.s32.totalorder %s24, 0
      %p135 = por %p133, %p134
      %s137 = sadd.s32 %s136, 1
      %p140 = scmp.eq.s32.totalorder %s18, 1
      %p141 = scmp.ne.s32.totalorder %s136, %s138
      %p142 = scmp.eq.s32.totalorder %s18, 0
      %p143 = por %p141, %p142
      %p144 = scmp.ne.s32.totalorder %s136, %s138
      %p145 = scmp.eq.s32.totalorder %s23, 1
      %p146 = por %p144, %p145
      %p147 = scmp.ne.s32.totalorder %s138, %s139
      %p148 = scmp.eq.s32.totalorder %s23, 0
      %p149 = por %p147, %p148
      %p150 = scmp.ne.s32.totalorder %s138, %s139
      %p151 = scmp.eq.s32.totalorder %s24, 1
      %p152 = por %p150, %p151
      %p154 = scmp.ne.s32.totalorder %s139, %s153
      %p155 = scmp.eq.s32.totalorder %s24, 0
      %p156 = por %p154, %p155
      %s158 = sadd.s32 %s157, 1
      %p161 = scmp.eq.s32.totalorder %s18, 1
      %p162 = scmp.ne.s32.totalorder %s157, %s159
      %p163 = scmp.eq.s32.totalorder %s18, 0
      %p164 = por %p162, %p163
      %p165 = scmp.ne.s32.totalorder %s157, %s159
      %p166 = scmp.eq.s32.totalorder %s23, 1
      %p167 = por %p165, %p166
      %p168 = scmp.ne.s32.totalorder %s159, %s160
      %p169 = scmp.eq.s32.totalorder %s23, 0
      %p170 = por %p168, %p169
      %p171 = scmp.ne.s32.totalorder %s159, %s160
      %p172 = scmp.eq.s32.totalorder %s24, 1
      %p173 = por %p171, %p172
      %p175 = scmp.ne.s32.totalorder %s160, %s174
      %p176 = scmp.eq.s32.totalorder %s24, 0
      %p177 = por %p175, %p176
      %s178 = ssub.s32 %s18, %s25
      %p179 = scmp.eq.s32.totalorder %s178, 0
      %s181 = sadd.s32 %s180, 1
      %s182 = scalar_select %p179, %s180, %s181
      %p185 = pneg %p179
      %p186 = scmp.eq.s32.totalorder %s18, 1
      %p187 = por %p185, %p186
      %p188 = scmp.ne.s32.totalorder %s180, %s183
      %p189 = scmp.eq.s32.totalorder %s18, 0
      %p190 = por %p188, %p189
      %p191 = scmp.ne.s32.totalorder %s180, %s183
      %p192 = scmp.eq.s32.totalorder %s23, 1
      %p193 = por %p191, %p192
      %p194 = scmp.ne.s32.totalorder %s183, %s184
      %p195 = scmp.eq.s32.totalorder %s23, 0
      %p196 = por %p194, %p195
      %p197 = scmp.ne.s32.totalorder %s183, %s184
      %p198 = scmp.eq.s32.totalorder %s24, 1
      %p199 = por %p197, %p198
      %p201 = scmp.ne.s32.totalorder %s184, %s200
      %p202 = scmp.eq.s32.totalorder %s24, 0
      %p203 = por %p201, %p202
      %p204 = scmp.le.s32.totalorder 1, %s18
      %p205 = scmp.lt.s32.totalorder %s18, 3
      %p206 = pnand %p204, %p205
      %p207 = pneg %p206
      // Predicated region
      $region9: #{tpu_custom_call.1} parent=5 // pred_check
        _
      $region10: #{tpu_custom_call.1} parent=5 // pred_check_branch
        %209 = sbr.rel (%p206) target = $region12
      $region11: #{tpu_custom_call.1} parent=5 // pred_region
        %s210 = ssub.s32 %s18, 1
        // Predicated region
        $region13: #{tpu_custom_call.1} parent=11 // pred_check
          %p211 = pneg %p65
        $region14: #{tpu_custom_call.1} parent=11 // pred_check_branch
          %213 = sbr.rel (%p211) target = $region16
        $region15: #{tpu_custom_call.1} parent=11 // pred_region
          _
        $region16: #{tpu_custom_call.1} parent=11 // pred_fallthru
          _
        // Predicated region
        $region17: #{tpu_custom_call.1} parent=11 // pred_check
          %p214 = pneg %p86
        $region18: #{tpu_custom_call.1} parent=11 // pred_check_branch
          %216 = sbr.rel (%p214) target = $region20
        $region19: #{tpu_custom_call.1} parent=11 // pred_region
          _
        $region20: #{tpu_custom_call.1} parent=11 // pred_fallthru
          _
        // Predicated region
        $region21: #{tpu_custom_call.1} parent=11 // pred_check
          %p217 = pneg %p107
        $region22: #{tpu_custom_call.1} parent=11 // pred_check_branch
          %219 = sbr.rel (%p217) target = $region24
        $region23: #{tpu_custom_call.1} parent=11 // pred_region
          _
        $region24: #{tpu_custom_call.1} parent=11 // pred_fallthru
          _
        // Predicated region
        $region25: #{tpu_custom_call.1} parent=11 // pred_check
          %p220 = pneg %p128
        $region26: #{tpu_custom_call.1} parent=11 // pred_check_branch
          %222 = sbr.rel (%p220) target = $region28
        $region27: #{tpu_custom_call.1} parent=11 // pred_region
          _
        $region28: #{tpu_custom_call.1} parent=11 // pred_fallthru
          _
        // Predicated region
        $region29: #{tpu_custom_call.1} parent=11 // pred_check
          %p223 = pneg %p149
        $region30: #{tpu_custom_call.1} parent=11 // pred_check_branch
          %225 = sbr.rel (%p223) target = $region32
        $region31: #{tpu_custom_call.1} parent=11 // pred_region
          _
        $region32: #{tpu_custom_call.1} parent=11 // pred_fallthru
          _
        // Predicated region
        $region33: #{tpu_custom_call.1} parent=11 // pred_check
          %p226 = pneg %p170
        $region34: #{tpu_custom_call.1} parent=11 // pred_check_branch
          %228 = sbr.rel (%p226) target = $region36
        $region35: #{tpu_custom_call.1} parent=11 // pred_region
          _
        $region36: #{tpu_custom_call.1} parent=11 // pred_fallthru
          _
      $region12: #{tpu_custom_call.1} parent=5 // pred_fallthru
        _
      %p229 = scmp.lt.s32.totalorder %s18, 2
      // Predicated region
      $region37: #{tpu_custom_call.1} parent=5 // pred_check
        %p230 = pneg %p229
      $region38: #{tpu_custom_call.1} parent=5 // pred_check_branch
        %232 = sbr.rel (%p230) target = $region40
      $region39: #{tpu_custom_call.1} parent=5 // pred_region
        // Predicated region
        $region41: #{tpu_custom_call.1} parent=39 // pred_check
          %p233 = pneg %p38
        $region42: #{tpu_custom_call.1} parent=39 // pred_check_branch
          %235 = sbr.rel (%p233) target = $region44
        $region43: #{tpu_custom_call.1} parent=39 // pred_region
          %p236 = scmp.lt.s32.totalorder %s18, 1
          %s237 = scalar_select %p236, %s18, 1
          %s238 = scalar_lea.vmem %s0, %s237
        $region44: #{tpu_custom_call.1} parent=39 // pred_fallthru
          _
      $region40: #{tpu_custom_call.1} parent=5 // pred_fallthru
        _
      %p239 = scmp.le.s32.totalorder 1, %s18
      %p240 = scmp.lt.s32.totalorder %s18, 3
      %p241 = pnand %p239, %p240
      %p242 = pneg %p241
      // Predicated region
      $region45: #{tpu_custom_call.1} parent=5 // pred_check
        _
      $region46: #{tpu_custom_call.1} parent=5 // pred_check_branch
        %244 = sbr.rel (%p241) target = $region48
      $region47: #{tpu_custom_call.1} parent=5 // pred_region
        %s245 = ssub.s32 %s18, 1
        %p246 = scmp.lt.s32.totalorder %s23, 1
        %s247 = scalar_select %p246, %s23, 1
        %s248 = scalar_lea.vmem %s0, %s247
        %p249 = pneg %p44
        %p250 = pneg %p41
        %p251 = pneg %p65
        %p252 = pneg %p62
        %p253 = pneg %p86
        %p254 = pneg %p83
        %p255 = pneg %p107
        %p256 = pneg %p104
        %p257 = pneg %p128
        %p258 = pneg %p125
        %p259 = pneg %p149
        %p260 = pneg %p146
        %p261 = pneg %p170
        %p262 = pneg %p167
        %p263 = pneg %p196
        %p264 = pneg %p193
        %s265 = sand.u32 %s183, 1
        %s266 = scalar_lea.sflag [#allocation4], %s265
        %s267 = sand.u32 %s183, 1
        %s268 = scalar_lea.vmem [#allocation3], %s267
        %p269 = scmp.lt.s32.totalorder %s23, 1
        %s270 = scalar_select %p269, %s23, 1
        %s271 = scalar_lea.vmem %s0, %s270
        %v273 = vld [vmem:[%s271] sm:$0x1]
        %v274 = vld [vmem:[%s1] sm:$0xff]
        %v275 = vld [vmem:[%s1 + $0x8] sm:$0xff]
        %v276 = vld [vmem:[%s1 + $0x10] sm:$0xff]
        %v277 = vld [vmem:[%s1 + $0x18] sm:$0xff]
        %v278 = vld [vmem:[%s1 + $0x20] sm:$0xff]
        %v279 = vld [vmem:[%s1 + $0x28] sm:$0xff]
        %v280 = vld [vmem:[%s1 + $0x30] sm:$0xff]
        %v281 = vld [vmem:[%s1 + $0x38] sm:$0xff]
        %283 = vset.pattern.permute.xlu0 0
        %284 = vperm.xlu0 %283, %v274
        %v285 = vpop.permute.xlu0 %284
        %288 = vset.pattern.permute.xlu0 0
        %289 = vperm.xlu0 %288, %v275
        %v290 = vpop.permute.xlu0 %289
        %293 = vset.pattern.permute.xlu0 0
        %294 = vperm.xlu0 %293, %v276
        %v295 = vpop.permute.xlu0 %294
        %298 = vset.pattern.permute.xlu0 0
        %299 = vperm.xlu0 %298, %v277
        %v300 = vpop.permute.xlu0 %299
        %303 = vset.pattern.permute.xlu0 0
        %304 = vperm.xlu0 %303, %v278
        %v305 = vpop.permute.xlu0 %304
        %308 = vset.pattern.permute.xlu0 0
        %309 = vperm.xlu0 %308, %v279
        %v310 = vpop.permute.xlu0 %309
        %313 = vset.pattern.permute.xlu0 0
        %314 = vperm.xlu0 %313, %v280
        %v315 = vpop.permute.xlu0 %314
        %318 = vset.pattern.permute.xlu0 0
        %319 = vperm.xlu0 %318, %v281
        %v320 = vpop.permute.xlu0 %319
        %v323 = vlaneseq
        %v324 = vshrl.u32 %v323, 7
        %v325 = vsub.s32 0, %v324
        %v326 = vrot.slane %v273, %v325
        %v328 = vmul.f32 %v285, %v326
        %v329 = vmul.f32 %v290, %v326
        %v330 = vmul.f32 %v295, %v326
        %v331 = vmul.f32 %v300, %v326
        %v332 = vmul.f32 %v305, %v326
        %v333 = vmul.f32 %v310, %v326
        %v334 = vmul.f32 %v315, %v326
        %v335 = vmul.f32 %v320, %v326
        %v336 = vld [vmem:[%s2] sm:$0xff]
        %v337 = vld [vmem:[%s2 + $0x8] sm:$0xff]
        %v338 = vld [vmem:[%s2 + $0x10] sm:$0xff]
        %v339 = vld [vmem:[%s2 + $0x18] sm:$0xff]
        %v340 = vld [vmem:[%s2 + $0x20] sm:$0xff]
        %v341 = vld [vmem:[%s2 + $0x28] sm:$0xff]
        %v342 = vld [vmem:[%s2 + $0x30] sm:$0xff]
        %v343 = vld [vmem:[%s2 + $0x38] sm:$0xff]
        %345 = vset.pattern.permute.xlu0 0
        %346 = vperm.xlu0 %345, %v336
        %v347 = vpop.permute.xlu0 %346
        %350 = vset.pattern.permute.xlu0 0
        %351 = vperm.xlu0 %350, %v337
        %v352 = vpop.permute.xlu0 %351
        %355 = vset.pattern.permute.xlu0 0
        %356 = vperm.xlu0 %355, %v338
        %v357 = vpop.permute.xlu0 %356
        %360 = vset.pattern.permute.xlu0 0
        %361 = vperm.xlu0 %360, %v339
        %v362 = vpop.permute.xlu0 %361
        %365 = vset.pattern.permute.xlu0 0
        %366 = vperm.xlu0 %365, %v340
        %v367 = vpop.permute.xlu0 %366
        %370 = vset.pattern.permute.xlu0 0
        %371 = vperm.xlu0 %370, %v341
        %v372 = vpop.permute.xlu0 %371
        %375 = vset.pattern.permute.xlu0 0
        %376 = vperm.xlu0 %375, %v342
        %v377 = vpop.permute.xlu0 %376
        %380 = vset.pattern.permute.xlu0 0
        %381 = vperm.xlu0 %380, %v343
        %v382 = vpop.permute.xlu0 %381
        %v384 = vadd.f32 %v328, %v347
        %v385 = vadd.f32 %v329, %v352
        %v386 = vadd.f32 %v330, %v357
        %v387 = vadd.f32 %v331, %v362
        %v388 = vadd.f32 %v332, %v367
        %v389 = vadd.f32 %v333, %v372
        %v390 = vadd.f32 %v334, %v377
        %v391 = vadd.f32 %v335, %v382
        %v392 = vmax.f32 %v384, 0.0
        %v393 = vmax.f32 %v385, 0.0
        %v394 = vmax.f32 %v386, 0.0
        %v395 = vmax.f32 %v387, 0.0
        %v396 = vmax.f32 %v388, 0.0
        %v397 = vmax.f32 %v389, 0.0
        %v398 = vmax.f32 %v390, 0.0
        %v399 = vmax.f32 %v391, 0.0
        %v400 = vpack.c.bf16 %v393, %v392
        %v401 = vpack.c.bf16 %v395, %v394
        %v402 = vpack.c.bf16 %v397, %v396
        %v403 = vpack.c.bf16 %v399, %v398
        %v404 = vld [vmem:[%s3] sm:$0xf]
        %v405 = vld [vmem:[%s3 + $0x4] sm:$0xf]
        %v406 = vld [vmem:[%s3 + $0x8] sm:$0xf]
        %v407 = vld [vmem:[%s3 + $0xc] sm:$0xf]
        %v408 = vld [vmem:[%s4] sm:$0xff]
        %v409 = vld [vmem:[%s4 + $0x8] sm:$0xff]
        %v410 = vld [vmem:[%s4 + $0x10] sm:$0xff]
        %v411 = vld [vmem:[%s4 + $0x18] sm:$0xff]
        %413 = vset.pattern.permute.xlu0 0
        %414 = vperm.xlu0 %413, %v408
        %v415 = vpop.permute.xlu0 %414
        %418 = vset.pattern.permute.xlu0 0
        %419 = vperm.xlu0 %418, %v409
        %v420 = vpop.permute.xlu0 %419
        %423 = vset.pattern.permute.xlu0 0
        %424 = vperm.xlu0 %423, %v410
        %v425 = vpop.permute.xlu0 %424
        %428 = vset.pattern.permute.xlu0 0
        %429 = vperm.xlu0 %428, %v411
        %v430 = vpop.permute.xlu0 %429
        %v436 = vunpack.c.l.b16 %v404
        %v437 = vunpack.c.l.b16 %v405
        %v438 = vunpack.c.l.b16 %v406
        %v439 = vunpack.c.l.b16 %v407
        %v440 = vpack.c.b16 %v437, %v436
        %v441 = vpack.c.b16 %v439, %v438
        %vm442 = vcmask 523264
        %v444 = vsel %vm442, %v440, 0
        %v447 = vsel %vm442, %v441, 0
        %449 = vmatprep.subr.bf16.mxu0 0
        %450 = vmatpush1.bf16.msra.mxu0 %v400
        %451 = vmatprep.subr.bf16.mxu0 0
        %452 = vmatpush1.bf16.msra.mxu0 %v401
        %453 = vmatprep.subr.bf16.mxu0 0
        %454 = vmatpush1.bf16.msra.mxu0 %v402
        %455 = vmatprep.subr.bf16.mxu0 0
        %456 = vmatpush1.bf16.msra.mxu0 %v403
        %457 = vmatprep.subr.bf16.mxu0 0
        %458 = vmatpush1.bf16.msra.mxu0 0
        %459 = vmatprep.subr.bf16.mxu0 0
        %460 = vmatpush1.bf16.msra.mxu0 0
        %461 = vmatprep.subr.bf16.mxu0 0
        %462 = vmatpush1.bf16.msra.mxu0 0
        %463 = vmatprep.subr.bf16.mxu0 0
        %464 = vmatpush1.bf16.msra.mxu0 0
        %465 = vmatprep.subr.bf16.mxu0 0
        %466 = vmatpush1.bf16.msra.mxu0 0
        %467 = vmatprep.subr.bf16.mxu0 0
        %468 = vmatpush1.bf16.msra.mxu0 0
        %469 = vmatprep.subr.bf16.mxu0 0
        %470 = vmatpush1.bf16.msra.mxu0 0
        %471 = vmatprep.subr.bf16.mxu0 0
        %472 = vmatpush1.bf16.msra.mxu0 0
        %473 = vmatprep.subr.bf16.mxu0 0
        %474 = vmatpush1.bf16.msra.mxu0 0
        %475 = vmatprep.subr.bf16.mxu0 0
        %476 = vmatpush1.bf16.msra.mxu0 0
        %477 = vmatprep.subr.bf16.mxu0 0
        %478 = vmatpush1.bf16.msra.mxu0 0
        %479 = vmatprep.subr.bf16.mxu0 0
        %480 = vmatpush1.bf16.msra.mxu0 0
        %481 = vmatprep.mubr.bf16.mxu0 0
        %482 = vmatmul.mubr.bf16.gmra.mrb[0].mxu0 %v444
        %v483 = vpop.f32.mrb[0].mxu0
        %v484 = vadd.f32 %v415, %v483
        %v485 = vpop.f32.mrb[0].mxu0
        %v486 = vpop.f32.mrb[0].mxu0
        %v487 = vadd.f32 %v420, %v486
        %v488 = vpop.f32.mrb[0].mxu0
        %489 = vmatprep.mubr.bf16.mxu0 0
        %490 = vmatmul.mubr.bf16.gmra.mrb[0].mxu0 %v447
        %v491 = vpop.f32.mrb[0].mxu0
        %v492 = vadd.f32 %v425, %v491
        %v493 = vpop.f32.mrb[0].mxu0
        %v494 = vpop.f32.mrb[0].mxu0
        %v495 = vadd.f32 %v430, %v494
        %v496 = vpop.f32.mrb[0].mxu0
        %497 = vdwg.mxu0
        %v498 = vmax.f32 %v484, 0.0
        %v499 = vmax.f32 %v487, 0.0
        %v500 = vmax.f32 %v492, 0.0
        %v501 = vmax.f32 %v495, 0.0
        %v502 = vld [vmem:[%s5] sm:$0xff]
        %v503 = vld [vmem:[%s5 + $0x8] sm:$0xff]
        %v504 = vld [vmem:[%s5 + $0x10] sm:$0xff]
        %v505 = vld [vmem:[%s5 + $0x18] sm:$0xff]
        %507 = vset.pattern.permute.xlu0 0
        %508 = vperm.xlu0 %507, %v502
        %v509 = vpop.permute.xlu0 %508
        %512 = vset.pattern.permute.xlu0 0
        %513 = vperm.xlu0 %512, %v503
        %v514 = vpop.permute.xlu0 %513
        %517 = vset.pattern.permute.xlu0 0
        %518 = vperm.xlu0 %517, %v504
        %v519 = vpop.permute.xlu0 %518
        %522 = vset.pattern.permute.xlu0 0
        %523 = vperm.xlu0 %522, %v505
        %v524 = vpop.permute.xlu0 %523
        %v526 = vmul.f32 %v498, %v509
        %v527 = vmul.f32 %v499, %v514
        %v528 = vmul.f32 %v500, %v519
        %v529 = vmul.f32 %v501, %v524
        %v530 = vadd.f32 %v526, %v527
        %v531 = vadd.f32 %v530, %v528
        %v532 = vadd.f32 %v531, %v529
        %v533 = vrot.slane %v532, 4
        %v534 = vadd.f32 %v532, %v533
        %v535 = vrot.slane %v534, 2
        %v536 = vadd.f32 %v534, %v535
        %v537 = vrot.slane %v536, 1
        %v538 = vadd.f32 %v536, %v537
        %v539 = vld [vmem:[#allocation2] sm:$0x1]
        %541 = vset.pattern.permute.xlu0 0
        %542 = vperm.xlu0 %541, %v539
        %v543 = vpop.permute.xlu0 %542
        %v545 = vlaneseq
        %v546 = vshrl.u32 %v545, 7
        %v547 = vsub.s32 0, %v546
        %v548 = vrot.slane %v543, %v547
        %v549 = vadd.f32 %v538, %v548
        %550 = vst [vmem:[%s268] sm:$0x1] %v549
        %s551 = sand.u32 %s183, 1
        %s552 = scalar_lea.sflag [#allocation4], %s551
        %s553 = sand.u32 %s183, 1
        %s554 = scalar_lea.vmem [#allocation3], %s553
        // Predicated region
        $region49: #{tpu_custom_call.1} parent=47 // pred_check
          %p555 = pneg %p193
        $region50: #{tpu_custom_call.1} parent=47 // pred_check_branch
          %557 = sbr.rel (%p555) target = $region52
        $region51: #{tpu_custom_call.1} parent=47 // pred_region
          %s559 = ssub.s32 16, 16
          %560 = vsyncadd %s552, %s559
          %s561 = smul.addr %s23, 16
          %s562 = scalar_lea.hbm %s7, %s561
          %s564 = sshll.u32 %s554, 4
          %s565 = int_to_ptr.vmem [resolvable:$true] %s564
          %567 = dma.vmem_to_hbm [thread:$0]  %s565, 16, %s562, %s552
        $region52: #{tpu_custom_call.1} parent=47 // pred_fallthru
          _
      $region48: #{tpu_custom_call.1} parent=5 // pred_fallthru
        _
      %p568 = scmp.le.s32.totalorder 2, %s18
      // Predicated region
      $region53: #{tpu_custom_call.1} parent=5 // pred_check
        %p569 = pneg %p568
      $region54: #{tpu_custom_call.1} parent=5 // pred_check_branch
        %571 = sbr.rel (%p569) target = $region56
      $region55: #{tpu_custom_call.1} parent=5 // pred_region
        %s572 = ssub.s32 %s18, 2
        // Predicated region
        $region57: #{tpu_custom_call.1} parent=55 // pred_check
          %p573 = pneg %p199
        $region58: #{tpu_custom_call.1} parent=55 // pred_check_branch
          %575 = sbr.rel (%p573) target = $region60
        $region59: #{tpu_custom_call.1} parent=55 // pred_region
          %s576 = sand.u32 %s184, 1
          %s577 = scalar_lea.sflag [#allocation4], %s576
          %s578 = sand.u32 %s184, 1
          %s579 = scalar_lea.vmem [#allocation3], %s578
          %580 = dma.done %s577, 16
        $region60: #{tpu_custom_call.1} parent=55 // pred_fallthru
          _
      $region56: #{tpu_custom_call.1} parent=5 // pred_fallthru
        _
    $region6: #{tpu_custom_call.1} parent=1 // loop_footer
      %s22 = sadd.s32 1, %s18
    $region7: #{tpu_custom_call.1} parent=1 // loop_footer_branch
      %17 = sbr.rel target = $region3
    $region8: #{tpu_custom_call.1} parent=1 // loop_exit
      _
    %581 = vsyncpa [#allocation4], 1
    %s582 = scalar_lea.sflag [#allocation4], 1
    %583 = vsyncpa %s582, 1

</llo_original>
